<compile_context>
chip_gen: v7x
topology: tpu7x:2x2x1
jax: 0.10.0
libtpu: 0.0.40
codegen_flags: <defaults>
</compile_context>

<pallas_src>
import functools
import math
import numpy as np

import jax
import jax.numpy as jnp
from jax import lax
from jax.experimental import pallas as pl
from jax.experimental.pallas import tpu as pltpu


# ----------------------------------------------------------------------------
# helpers
# ----------------------------------------------------------------------------
def _rotate_half(t):
    """[a | b] -> [b | a] along the last dim (rotate-half RoPE layout)."""
    d = t.shape[-1]
    if d % 128 == 0:
        return pltpu.roll(t, shift=d // 2, axis=-1)       # single XLU rotation
    h = d // 2                                             # small-D fallback
    return jnp.concatenate([t[..., h:], t[..., :h]], axis=-1)


# ----------------------------------------------------------------------------
# Kernel 1: fused QKV projection + rotate-half RoPE (one kv group per step)
# ----------------------------------------------------------------------------
def _qkv_rope_kernel(x_ref, w_ref, cos_ref, sin_ref, q_ref, k_ref, v_ref, *,
                     q_per_kv, head_dim):
    G, D = q_per_kv, head_dim

    # one fused MXU matmul for this group's [q heads | k | v] columns
    qkv = jnp.dot(x_ref[0], w_ref[0], preferred_element_type=jnp.float32)

    cos = cos_ref[...]                                    # [ts, D]
    sin = sin_ref[...]                                    # [ts, D] = [-sin | +sin]

    def rope(sl):                                         # sl: [ts, D] f32
        return sl * cos + _rotate_half(sl) * sin

    for g in range(G):                                    # query heads of group
        q_ref[0, g] = rope(qkv[:, g * D:(g + 1) * D]).astype(q_ref.dtype)
    k_ref[0, 0] = rope(qkv[:, G * D:(G + 1) * D]).astype(k_ref.dtype)
    v_ref[0, 0] = qkv[:, (G + 1) * D:(G + 2) * D].astype(v_ref.dtype)


# ----------------------------------------------------------------------------
# Kernel 2: flash attention (online softmax) on a flat lower-triangular grid
# ----------------------------------------------------------------------------
def _flash_kernel(qi_tab, ki_tab, q_ref, k_ref, v_ref, o_ref,
                  acc_sc, m_sc, l_sc, *,
                  num_heads, num_kv_heads, head_dim, block_q, block_k):
    H, Hkv, D = num_heads, num_kv_heads, head_dim
    G = H // Hkv

    pidx = pl.program_id(1)
    qi = qi_tab[pidx]
    ki = ki_tab[pidx]
    q_start = qi * block_q
    k_start = ki * block_k
    k_end = k_start + (block_k - 1)                       # inclusive
    ki_last = (q_start + block_q - 1) // block_k          # last kv block needed

    @pl.when(ki == 0)
    def _init():
        m_sc[...] = jnp.full(m_sc.shape, -jnp.inf, m_sc.dtype)
        l_sc[...] = jnp.zeros(l_sc.shape, l_sc.dtype)
        acc_sc[...] = jnp.zeros(acc_sc.shape, acc_sc.dtype)

    def attend(masked):
        q_all = q_ref[0]                                  # [H,   tq, D] bf16
        k_blk = k_ref[0]                                  # [Hkv, tk, D] bf16
        v_blk = v_ref[0]                                  # [Hkv, tk, D] bf16
        for kvh in range(Hkv):
            # fold the q_per_kv query heads sharing this kv head into one matmul
            q_grp = q_all[kvh * G:(kvh + 1) * G].reshape(G * block_q, D)
            k_h = k_blk[kvh]                              # [tk, D]
            v_h = v_blk[kvh]                              # [tk, D]

            s = lax.dot_general(q_grp, k_h, (((1,), (1,)), ((), ())),
                                preferred_element_type=jnp.float32)  # [G*tq, tk]
            if masked:                                    # diagonal blocks only
                row = lax.broadcasted_iota(jnp.int32, s.shape, 0) % block_q
                col = lax.broadcasted_iota(jnp.int32, s.shape, 1)
                s = jnp.where(k_start + col <= q_start + row, s, -jnp.inf)

            m_prev = m_sc[kvh]                            # [G*tq, 1]
            m_new = jnp.maximum(m_prev, jnp.max(s, axis=-1, keepdims=True))
            alpha = jnp.exp(m_prev - m_new)
            p = jnp.exp(s - m_new)
            l_sc[kvh] = alpha * l_sc[kvh] + jnp.sum(p, axis=-1, keepdims=True)
            acc_sc[kvh] = alpha * acc_sc[kvh] + lax.dot_general(
                p.astype(v_h.dtype), v_h, (((1,), (0,)), ((), ())),
                preferred_element_type=jnp.float32)
            m_sc[kvh] = m_new

    # strictly below the diagonal: no masking work at all
    @pl.when(k_end <= q_start)
    def _unmasked():
        attend(masked=False)

    # blocks touching the diagonal: apply the causal mask
    @pl.when(k_end > q_start)
    def _masked():
        attend(masked=True)

    # epilogue: normalize and scatter heads into the lane-dense [tq, E] output
    @pl.when(ki == ki_last)
    def _epilogue():
        for kvh in range(Hkv):
            inv_l = pl.reciprocal(l_sc[kvh], approx=True)           # EUP slot
            attn = acc_sc[kvh] * inv_l                              # [G*tq, D]
            for g in range(G):
                h = kvh * G + g
                o_ref[0, :, h * D:(h + 1) * D] = (
                    attn[g * block_q:(g + 1) * block_q].astype(o_ref.dtype))


# ----------------------------------------------------------------------------
# Kernel 3: output projection (tiled matmul, full-K contraction)
# ----------------------------------------------------------------------------
def _oproj_kernel(a_ref, w_ref, o_ref):
    o_ref[0] = jnp.dot(a_ref[0], w_ref[...],
                       preferred_element_type=jnp.float32).astype(o_ref.dtype)


# ----------------------------------------------------------------------------
# Host-side wrapper
# ----------------------------------------------------------------------------
def causal_self_attention(x, wq, wk, wv, wo, *, num_heads, num_kv_heads,
                          head_dim, rope_base, block_q=256, block_k=256,
                          block_proj=256, block_out_n=512,
                          compute_dtype=jnp.bfloat16):
    B, S, E = x.shape
    H, Hkv, D = num_heads, num_kv_heads, head_dim
    G = H // Hkv
    assert H * D == E and H % Hkv == 0 and D % 2 == 0

    block_q = min(block_q, S)
    block_k = min(block_k, S)
    block_proj = min(block_proj, S)
    block_out_n = min(block_out_n, E)
    for blk in (block_q, block_k, block_proj):
        assert S % blk == 0 and (blk % 8 == 0 or blk == S), \
            "blocks must divide S and be multiples of 8"   # TODO(synk): ragged S
    assert E % block_out_n == 0

    scale = 1.0 / math.sqrt(D)

    # --- host-side weight prep ----------------------------------------------
    # Fold the RoPE interleave permutation into Wq/Wk columns (deinterleave to
    # rotate-half layout); the permutation cancels in QK^T.  1/sqrt(D) folded
    # into Wq (RoPE is a rotation, so pre-/post-RoPE scaling is equivalent).
    perm = np.concatenate([np.arange(0, D, 2), np.arange(1, D, 2)])

    def deinterleave(w_t, nh):                           # w_t: [E, nh*D]
        return w_t.reshape(E, nh, D)[:, :, perm].reshape(E, nh * D)

    wq_t = deinterleave(wq.T * scale, H)                 # [E, H*D]
    wk_t = deinterleave(wk.T, Hkv)                       # [E, Hkv*D]
    wv_t = wv.T                                          # [E, Hkv*D]
    # per-kv-group weight tiles: [q heads of group | k head | v head]
    w_grp = jnp.stack(
        [jnp.concatenate([wq_t[:, g * G * D:(g + 1) * G * D],
                          wk_t[:, g * D:(g + 1) * D],
                          wv_t[:, g * D:(g + 1) * D]], axis=1)
         for g in range(Hkv)], axis=0).astype(compute_dtype)   # [Hkv, E, (G+2)*D]
    wo_t = wo.T.astype(compute_dtype)                          # [E, E]

    # RoPE tables in rotate-half layout; sign folded into sin: [-sin | +sin]
    half = D // 2
    inv_freq = 1.0 / (rope_base ** (jnp.arange(half, dtype=jnp.float32) * 2.0 / D))
    ang = jnp.arange(S, dtype=jnp.float32)[:, None] * inv_freq[None, :]   # [S, D/2]
    cos_tab = jnp.concatenate([jnp.cos(ang), jnp.cos(ang)], axis=-1)      # [S, D]
    sin_tab = jnp.concatenate([-jnp.sin(ang), jnp.sin(ang)], axis=-1)     # [S, D]

    x_c = x.astype(compute_dtype)     # halve kernel-1 x DMA traffic

    vmem_limit = 48 * 1024 * 1024     # safe on v7x (64 MiB physical)

    # ---------------- kernel 1: QKV projection + RoPE -----------------------
    n_proj = S // block_proj
    cols = (G + 2) * D
    qkv_kernel = functools.partial(_qkv_rope_kernel, q_per_kv=G, head_dim=D)
    q_hm, k_hm, v_hm = pl.pallas_call(
        qkv_kernel,
        out_shape=(jax.ShapeDtypeStruct((B, H, S, D), compute_dtype),
                   jax.ShapeDtypeStruct((B, Hkv, S, D), compute_dtype),
                   jax.ShapeDtypeStruct((B, Hkv, S, D), compute_dtype)),
        grid=(B, Hkv, n_proj),
        in_specs=[pl.BlockSpec((1, block_proj, E), lambda b, g, s: (b, s, 0)),
                  pl.BlockSpec((1, E, cols), lambda b, g, s: (g, 0, 0)),
                  pl.BlockSpec((block_proj, D), lambda b, g, s: (s, 0)),
                  pl.BlockSpec((block_proj, D), lambda b, g, s: (s, 0))],
        out_specs=(pl.BlockSpec((1, G, block_proj, D), lambda b, g, s: (b, g, s, 0)),
                   pl.BlockSpec((1, 1, block_proj, D), lambda b, g, s: (b, g, s, 0)),
                   pl.BlockSpec((1, 1, block_proj, D), lambda b, g, s: (b, g, s, 0))),
        compiler_params=pltpu.CompilerParams(
            dimension_semantics=("parallel", "parallel", "parallel"),
            vmem_limit_bytes=vmem_limit),
    )(x_c, w_grp, cos_tab, sin_tab)

    # ---------------- kernel 2: flash attention (triangular grid) -----------
    n_q = S // block_q
    qi_list, ki_list = [], []
    for qi in range(n_q):
        ki_last = (qi * block_q + block_q - 1) // block_k
        for ki in range(ki_last + 1):
            qi_list.append(qi)
            ki_list.append(ki)
    qi_tab = jnp.asarray(qi_list, jnp.int32)
    ki_tab = jnp.asarray(ki_list, jnp.int32)
    num_pairs = len(qi_list)

    flash_kernel = functools.partial(_flash_kernel, num_heads=H,
                                     num_kv_heads=Hkv, head_dim=D,
                                     block_q=block_q, block_k=block_k)
    attn = pl.pallas_call(
        flash_kernel,
        out_shape=jax.ShapeDtypeStruct((B, S, E), compute_dtype),
        grid_spec=pltpu.PrefetchScalarGridSpec(
            num_scalar_prefetch=2,
            grid=(B, num_pairs),
            in_specs=[pl.BlockSpec((1, H, block_q, D),
                                   lambda b, p, qt, kt: (b, 0, qt[p], 0)),
                      pl.BlockSpec((1, Hkv, block_k, D),
                                   lambda b, p, qt, kt: (b, 0, kt[p], 0)),
                      pl.BlockSpec((1, Hkv, block_k, D),
                                   lambda b, p, qt, kt: (b, 0, kt[p], 0))],
            out_specs=pl.BlockSpec((1, block_q, E),
                                   lambda b, p, qt, kt: (b, qt[p], 0)),
            scratch_shapes=[pltpu.VMEM((Hkv, G * block_q, D), jnp.float32),
                            pltpu.VMEM((Hkv, G * block_q, 1), jnp.float32),
                            pltpu.VMEM((Hkv, G * block_q, 1), jnp.float32)]),
        compiler_params=pltpu.CompilerParams(
            dimension_semantics=("parallel", "arbitrary"),
            vmem_limit_bytes=vmem_limit),
    )(qi_tab, ki_tab, q_hm, k_hm, v_hm)

    # ---------------- kernel 3: output projection ----------------------------
    n_m = S // block_q
    n_n = E // block_out_n
    out = pl.pallas_call(
        _oproj_kernel,
        out_shape=jax.ShapeDtypeStruct((B, S, E), x.dtype),
        grid=(B, n_m, n_n),
        in_specs=[pl.BlockSpec((1, block_q, E), lambda b, m, n: (b, m, 0)),
                  pl.BlockSpec((E, block_out_n), lambda b, m, n: (0, n))],
        out_specs=pl.BlockSpec((1, block_q, block_out_n),
                               lambda b, m, n: (b, m, n)),
        compiler_params=pltpu.CompilerParams(
            dimension_semantics=("parallel", "parallel", "parallel"),
            vmem_limit_bytes=vmem_limit),
    )(attn, wo_t)
    return out


# ----------------------------------------------------------------------------
# Pure-JAX reference mirroring the PyTorch forward (sanity check)
# ----------------------------------------------------------------------------
def _reference(x, wq, wk, wv, wo, *, num_heads, num_kv_heads, head_dim, rope_base):
    B, S, E = x.shape
    hi = lax.Precision.HIGHEST
    q = jnp.einsum('bse,fe->bsf', x, wq, precision=hi).reshape(B, S, num_heads, head_dim)
    k = jnp.einsum('bse,fe->bsf', x, wk, precision=hi).reshape(B, S, num_kv_heads, head_dim)
    v = jnp.einsum('bse,fe->bsf', x, wv, precision=hi).reshape(B, S, num_kv_heads, head_dim)

    def rope(t):
        half = head_dim // 2
        theta = 1.0 / (rope_base ** (jnp.arange(half, dtype=jnp.float32) * 2.0 / head_dim))
        ang = jnp.arange(S, dtype=jnp.float32)[:, None] * theta[None, :]
        cos, sin = jnp.cos(ang), jnp.sin(ang)
        t2 = t.reshape(B, S, t.shape[2], half, 2)
        x0, x1 = t2[..., 0], t2[..., 1]
        o0 = x0 * cos[None, :, None, :] - x1 * sin[None, :, None, :]
        o1 = x1 * cos[None, :, None, :] + x0 * sin[None, :, None, :]
        return jnp.stack([o0, o1], axis=-1).reshape(B, S, t.shape[2], head_dim)

    q, k = rope(q), rope(k)
    q_per_kv = num_heads // num_kv_heads
    k = jnp.repeat(k, q_per_kv, axis=2)
    v = jnp.repeat(v, q_per_kv, axis=2)

    q = q.transpose(0, 2, 1, 3)
    k = k.transpose(0, 2, 1, 3)
    v = v.transpose(0, 2, 1, 3)
    s = jnp.einsum('bhqd,bhkd->bhqk', q, k, precision=hi) / (head_dim ** 0.5)
    causal = jnp.tril(jnp.ones((S, S), bool))
    s = jnp.where(causal, s, -jnp.inf)
    p = jax.nn.softmax(s, axis=-1)
    out = jnp.einsum('bhqk,bhkd->bhqd', p, v, precision=hi)
    out = out.transpose(0, 2, 1, 3).reshape(B, S, E)
    return jnp.einsum('bse,fe->bsf', out, wo, precision=hi)


if __name__ == "__main__":
    # small LLM_Args-equivalent config (exercises GQA, multi-block tiling,
    # triangular grid, group-tiled weights)
    num_heads, num_kv_heads = 4, 2
    head_dim = 16
    embed_dim = num_heads * head_dim          # 64
    rope_base = 10000
    B, S = 2, 32                              # max_seq_len >= S

    key = jax.random.PRNGKey(0)
    kx, kq, kk, kvk, ko = jax.random.split(key, 5)
    x = jax.random.normal(kx, (B, S, embed_dim), jnp.float32)
    wq = jax.random.normal(kq, (num_heads * head_dim, embed_dim), jnp.float32) * 0.05
    wk = jax.random.normal(kk, (num_kv_heads * head_dim, embed_dim), jnp.float32) * 0.05
    wv = jax.random.normal(kvk, (num_kv_heads * head_dim, embed_dim), jnp.float32) * 0.05
    wo = jax.random.normal(ko, (embed_dim, embed_dim), jnp.float32) * 0.05

    cfg = dict(num_heads=num_heads, num_kv_heads=num_kv_heads,
               head_dim=head_dim, rope_base=rope_base)

    out = causal_self_attention(x, wq, wk, wv, wo,
                                block_q=16, block_k=16, block_proj=16, **cfg)
    out = jax.block_until_ready(out)

    ref = jax.block_until_ready(_reference(x, wq, wk, wv, wo, **cfg))
    np.testing.assert_allclose(np.asarray(out), np.asarray(ref), atol=2e-2, rtol=2e-2)

    print("KERNEL_OK")
</pallas_src>

<mosaic_0001>
module attributes {stable_mosaic.version = 11 : i64} {
  func.func @_qkv_rope_kernel(%arg0: i32, %arg1: i32, %arg2: i32, %arg3: memref<1x16x64xbf16, #tpu.memory_space<vmem>>, %arg4: memref<1x64x64xbf16, #tpu.memory_space<vmem>>, %arg5: memref<16x16xf32, #tpu.memory_space<vmem>>, %arg6: memref<16x16xf32, #tpu.memory_space<vmem>>, %arg7: memref<1x2x16x16xbf16, #tpu.memory_space<vmem>>, %arg8: memref<1x1x16x16xbf16, #tpu.memory_space<vmem>>, %arg9: memref<1x1x16x16xbf16, #tpu.memory_space<vmem>>) attributes {dimension_semantics = [#tpu.dimension_semantics<parallel>, #tpu.dimension_semantics<parallel>, #tpu.dimension_semantics<parallel>], iteration_bounds = array<i64: 2, 2, 2>, scalar_prefetch = 0 : i64, scratch_operands = 0 : i64, tpu.core_type = #tpu.core_type<tc>, window_params = [{transform_indices = @transform_0, window_bounds = array<i64: 1, 16, 64>}, {transform_indices = @transform_1, window_bounds = array<i64: 1, 64, 64>}, {transform_indices = @transform_2, window_bounds = array<i64: 16, 16>}, {transform_indices = @transform_3, window_bounds = array<i64: 16, 16>}, {transform_indices = @transform_4, window_bounds = array<i64: 1, 2, 16, 16>}, {transform_indices = @transform_5, window_bounds = array<i64: 1, 1, 16, 16>}, {transform_indices = @transform_6, window_bounds = array<i64: 1, 1, 16, 16>}]} {
    %c0 = arith.constant 0 : index
    %c0_0 = arith.constant 0 : index
    %c0_1 = arith.constant 0 : index
    %0 = vector.load %arg3[%c0, %c0_0, %c0_1] : memref<1x16x64xbf16, #tpu.memory_space<vmem>>, vector<1x16x64xbf16>
    %1 = vector.shape_cast %0 : vector<1x16x64xbf16> to vector<16x64xbf16>
    %c0_2 = arith.constant 0 : index
    %c0_3 = arith.constant 0 : index
    %c0_4 = arith.constant 0 : index
    %2 = vector.load %arg4[%c0_2, %c0_3, %c0_4] : memref<1x64x64xbf16, #tpu.memory_space<vmem>>, vector<1x64x64xbf16>
    %3 = vector.shape_cast %2 : vector<1x64x64xbf16> to vector<64x64xbf16>
    %cst = arith.constant dense<0.000000e+00> : vector<16x64xf32>
    %4 = tpu.matmul %1, %3, %cst {dimension_numbers = #tpu.dot_dimension_numbers<[1], [0], [0], [1], [0, 0, 1, 1], [], []>} : vector<16x64xbf16>, vector<64x64xbf16>, vector<16x64xf32> -> vector<16x64xf32>
    %c0_5 = arith.constant 0 : index
    %c0_6 = arith.constant 0 : index
    %5 = vector.load %arg5[%c0_5, %c0_6] : memref<16x16xf32, #tpu.memory_space<vmem>>, vector<16x16xf32>
    %c0_7 = arith.constant 0 : index
    %c0_8 = arith.constant 0 : index
    %6 = vector.load %arg6[%c0_7, %c0_8] : memref<16x16xf32, #tpu.memory_space<vmem>>, vector<16x16xf32>
    %7 = vector.extract_strided_slice %4 {offsets = [0, 0], sizes = [16, 16], strides = [1, 1]} : vector<16x64xf32> to vector<16x16xf32>
    %8 = arith.mulf %7, %5 : vector<16x16xf32>
    %9 = vector.extract_strided_slice %7 {offsets = [0, 8], sizes = [16, 8], strides = [1, 1]} : vector<16x16xf32> to vector<16x8xf32>
    %10 = vector.extract_strided_slice %7 {offsets = [0, 0], sizes = [16, 8], strides = [1, 1]} : vector<16x16xf32> to vector<16x8xf32>
    %11 = tpu.concatenate %9, %10 in 1 : vector<16x8xf32>, vector<16x8xf32> -> vector<16x16xf32>
    %12 = arith.mulf %11, %6 : vector<16x16xf32>
    %13 = arith.addf %8, %12 : vector<16x16xf32>
    %14 = arith.truncf %13 : vector<16x16xf32> to vector<16x16xbf16>
    %c0_9 = arith.constant 0 : index
    %c0_10 = arith.constant 0 : index
    %c0_11 = arith.constant 0 : index
    %c0_12 = arith.constant 0 : index
    %15 = vector.load %arg7[%c0_9, %c0_10, %c0_11, %c0_12] : memref<1x2x16x16xbf16, #tpu.memory_space<vmem>>, vector<1x1x16x16xbf16>
    %16 = vector.shape_cast %15 : vector<1x1x16x16xbf16> to vector<16x16xbf16>
    %17 = vector.shape_cast %14 : vector<16x16xbf16> to vector<1x1x16x16xbf16>
    tpu.vector_store %arg7[%c0_9, %c0_10, %c0_11, %c0_12], %17 {strides = array<i32>} : memref<1x2x16x16xbf16, #tpu.memory_space<vmem>>, vector<1x1x16x16xbf16>,
    %18 = vector.extract_strided_slice %4 {offsets = [0, 16], sizes = [16, 16], strides = [1, 1]} : vector<16x64xf32> to vector<16x16xf32>
    %19 = arith.mulf %18, %5 : vector<16x16xf32>
    %20 = vector.extract_strided_slice %18 {offsets = [0, 8], sizes = [16, 8], strides = [1, 1]} : vector<16x16xf32> to vector<16x8xf32>
    %21 = vector.extract_strided_slice %18 {offsets = [0, 0], sizes = [16, 8], strides = [1, 1]} : vector<16x16xf32> to vector<16x8xf32>
    %22 = tpu.concatenate %20, %21 in 1 : vector<16x8xf32>, vector<16x8xf32> -> vector<16x16xf32>
    %23 = arith.mulf %22, %6 : vector<16x16xf32>
    %24 = arith.addf %19, %23 : vector<16x16xf32>
    %25 = arith.truncf %24 : vector<16x16xf32> to vector<16x16xbf16>
    %c0_13 = arith.constant 0 : index
    %c1 = arith.constant 1 : index
    %c0_14 = arith.constant 0 : index
    %c0_15 = arith.constant 0 : index
    %26 = vector.load %arg7[%c0_13, %c1, %c0_14, %c0_15] : memref<1x2x16x16xbf16, #tpu.memory_space<vmem>>, vector<1x1x16x16xbf16>
    %27 = vector.shape_cast %26 : vector<1x1x16x16xbf16> to vector<16x16xbf16>
    %28 = vector.shape_cast %25 : vector<16x16xbf16> to vector<1x1x16x16xbf16>
    tpu.vector_store %arg7[%c0_13, %c1, %c0_14, %c0_15], %28 {strides = array<i32>} : memref<1x2x16x16xbf16, #tpu.memory_space<vmem>>, vector<1x1x16x16xbf16>,
    %29 = vector.extract_strided_slice %4 {offsets = [0, 32], sizes = [16, 16], strides = [1, 1]} : vector<16x64xf32> to vector<16x16xf32>
    %30 = arith.mulf %29, %5 : vector<16x16xf32>
    %31 = vector.extract_strided_slice %29 {offsets = [0, 8], sizes = [16, 8], strides = [1, 1]} : vector<16x16xf32> to vector<16x8xf32>
    %32 = vector.extract_strided_slice %29 {offsets = [0, 0], sizes = [16, 8], strides = [1, 1]} : vector<16x16xf32> to vector<16x8xf32>
    %33 = tpu.concatenate %31, %32 in 1 : vector<16x8xf32>, vector<16x8xf32> -> vector<16x16xf32>
    %34 = arith.mulf %33, %6 : vector<16x16xf32>
    %35 = arith.addf %30, %34 : vector<16x16xf32>
    %36 = arith.truncf %35 : vector<16x16xf32> to vector<16x16xbf16>
    %c0_16 = arith.constant 0 : index
    %c0_17 = arith.constant 0 : index
    %c0_18 = arith.constant 0 : index
    %c0_19 = arith.constant 0 : index
    %37 = vector.load %arg8[%c0_16, %c0_17, %c0_18, %c0_19] : memref<1x1x16x16xbf16, #tpu.memory_space<vmem>>, vector<1x1x16x16xbf16>
    %38 = vector.shape_cast %37 : vector<1x1x16x16xbf16> to vector<16x16xbf16>
    %39 = vector.shape_cast %36 : vector<16x16xbf16> to vector<1x1x16x16xbf16>
    tpu.vector_store %arg8[%c0_16, %c0_17, %c0_18, %c0_19], %39 {strides = array<i32>} : memref<1x1x16x16xbf16, #tpu.memory_space<vmem>>, vector<1x1x16x16xbf16>,
    %40 = vector.extract_strided_slice %4 {offsets = [0, 48], sizes = [16, 16], strides = [1, 1]} : vector<16x64xf32> to vector<16x16xf32>
    %41 = arith.truncf %40 : vector<16x16xf32> to vector<16x16xbf16>
    %c0_20 = arith.constant 0 : index
    %c0_21 = arith.constant 0 : index
    %c0_22 = arith.constant 0 : index
    %c0_23 = arith.constant 0 : index
    %42 = vector.load %arg9[%c0_20, %c0_21, %c0_22, %c0_23] : memref<1x1x16x16xbf16, #tpu.memory_space<vmem>>, vector<1x1x16x16xbf16>
    %43 = vector.shape_cast %42 : vector<1x1x16x16xbf16> to vector<16x16xbf16>
    %44 = vector.shape_cast %41 : vector<16x16xbf16> to vector<1x1x16x16xbf16>
    tpu.vector_store %arg9[%c0_20, %c0_21, %c0_22, %c0_23], %44 {strides = array<i32>} : memref<1x1x16x16xbf16, #tpu.memory_space<vmem>>, vector<1x1x16x16xbf16>,
    return
  }
  func.func @transform_0(%arg0: i32, %arg1: i32, %arg2: i32) -> (i32, i32, i32) {
    %c0_i32 = arith.constant 0 : i32
    %c0_i32_0 = arith.constant 0 : i32
    return %arg0, %arg2, %c0_i32 : i32, i32, i32
  }
  func.func @transform_1(%arg0: i32, %arg1: i32, %arg2: i32) -> (i32, i32, i32) {
    %c0_i32 = arith.constant 0 : i32
    %c0_i32_0 = arith.constant 0 : i32
    %c0_i32_1 = arith.constant 0 : i32
    return %arg1, %c0_i32, %c0_i32_0 : i32, i32, i32
  }
  func.func @transform_2(%arg0: i32, %arg1: i32, %arg2: i32) -> (i32, i32) {
    %c0_i32 = arith.constant 0 : i32
    %c0_i32_0 = arith.constant 0 : i32
    return %arg2, %c0_i32 : i32, i32
  }
  func.func @transform_3(%arg0: i32, %arg1: i32, %arg2: i32) -> (i32, i32) {
    %c0_i32 = arith.constant 0 : i32
    %c0_i32_0 = arith.constant 0 : i32
    return %arg2, %c0_i32 : i32, i32
  }
  func.func @transform_4(%arg0: i32, %arg1: i32, %arg2: i32) -> (i32, i32, i32, i32) {
    %c0_i32 = arith.constant 0 : i32
    %c0_i32_0 = arith.constant 0 : i32
    return %arg0, %arg1, %arg2, %c0_i32 : i32, i32, i32, i32
  }
  func.func @transform_5(%arg0: i32, %arg1: i32, %arg2: i32) -> (i32, i32, i32, i32) {
    %c0_i32 = arith.constant 0 : i32
    %c0_i32_0 = arith.constant 0 : i32
    return %arg0, %arg1, %arg2, %c0_i32 : i32, i32, i32, i32
  }
  func.func @transform_6(%arg0: i32, %arg1: i32, %arg2: i32) -> (i32, i32, i32, i32) {
    %c0_i32 = arith.constant 0 : i32
    %c0_i32_0 = arith.constant 0 : i32
    return %arg0, %arg1, %arg2, %c0_i32 : i32, i32, i32, i32
  }
}

</mosaic_0001>

<llo_original>
// kernel: tpu_custom_call.1
$region0: #{tpu_custom_call.1}
  #allocation0 [shape = 'u32[]', space=smem, size = 0x4, offset = 0x4, fixed_abs, tag = 'smem constant byte address 0x4 - core index']
  #allocation1 [shape = 'u32[144,128]{1,0:T(1,128)}', space=vmem, size = 0x12000, scoped, tag = 'internal scratch']
  %s0 = inlined_call_operand.vmem [shape: bf16[2,32,64], index: 0, kind: input, shape index: {}]
  %s1 = inlined_call_operand.vmem [shape: bf16[2,64,64], index: 1, kind: input, shape index: {}]
  %s2 = inlined_call_operand.vmem [shape: f32[32,16], index: 2, kind: input, shape index: {}]
  %s3 = inlined_call_operand.vmem [shape: f32[32,16], index: 3, kind: input, shape index: {}]
  %s4 = inlined_call_operand.vmem [shape: bf16[2,4,32,16], index: 4, kind: output, shape index: {0}]
  %s5 = inlined_call_operand.vmem [shape: bf16[2,2,32,16], index: 5, kind: output, shape index: {1}]
  %s6 = inlined_call_operand.vmem [shape: bf16[2,2,32,16], index: 6, kind: output, shape index: {2}]
  %7 = xla_tuple %s4, %s5, %s6
  %s8 = sld [smem:[#allocation0]]
  $region102: #{tpu_custom_call.1} parent=0
    _
  %s10 = ssub.s32 1, %s8
  %s11 = scalar_select 0, %s10, %s8
  $region1: #{tpu_custom_call.1} parent=0
    #allocation2 [shape = 'u8[16384]{0}', space=vmem, size = 0x4000, scoped, tag = 'output window, operand 0']
    loop: start=0, step=1, limit=10
    $region2: #{tpu_custom_call.1} parent=1 // loop_pre_header
      _
    $region3: #{tpu_custom_call.1} parent=1 // loop_header
      %s13 = sphi 0, %s17
      %p14 = scmp.ge.s32.totalorder %s13, 10
      %s20 = sphi 0, %s39
      %s21 = sphi 0, %s35
      %s22 = sphi 0, %s31
      %s23 = sphi 0, %s20
      %s24 = sphi 0, %s21
      %s25 = sphi 0, %s22
      %s26 = sphi 0, %s23
      %s27 = sphi 0, %s24
      %s28 = sphi 0, %s25
      %s44 = sphi 0, %s46
      %s47 = sphi 0, %s44
      %s48 = sphi 0, %s47
      %s64 = sphi 0, %s48
      %s70 = sphi 0, %s72
      %s73 = sphi 0, %s70
      %s74 = sphi 0, %s73
      %s90 = sphi 0, %s74
      %s96 = sphi 0, %s98
      %s99 = sphi 0, %s96
      %s100 = sphi 0, %s99
      %s116 = sphi 0, %s100
      %s122 = sphi 0, %s124
      %s125 = sphi 0, %s122
      %s126 = sphi 0, %s125
      %s142 = sphi 0, %s126
      %s152 = sphi 0, %s154
      %s155 = sphi 0, %s152
      %s156 = sphi 0, %s155
      %s172 = sphi 0, %s156
      %s182 = sphi 0, %s184
      %s185 = sphi 0, %s182
      %s186 = sphi 0, %s185
      %s202 = sphi 0, %s186
      %s212 = sphi 0, %s214
      %s215 = sphi 0, %s212
      %s216 = sphi 0, %s215
      %s232 = sphi 0, %s216
    $region4: #{tpu_custom_call.1} parent=1 // loop_header_branch
      %16 = sbr.rel (%p14) target = $region8
    $region5: #{tpu_custom_call.1} parent=1 // loop_body
      %s18 = ssub.s32 %s13, 1
      %s19 = ssub.s32 %s13, 2
      %s29 = sadd.s32 1, %s22
      %p30 = scmp.ge.s32.totalorder %s29, 2
      %s31 = scalar_select %p30, 0, %s29
      %s32 = sadd.s32 1, %s21
      %s33 = scalar_select %p30, %s32, %s21
      %p34 = scmp.ge.s32.totalorder %s33, 2
      %s35 = scalar_select %p34, 0, %s33
      %s36 = sadd.s32 1, %s20
      %s37 = scalar_select %p34, %s36, %s20
      %p38 = scmp.ge.s32.totalorder %s37, 2
      %s39 = scalar_select %p38, 0, %s37
      %s40 = ssub.s32 %s20, %s39
      %s41 = ssub.s32 %s22, %s31
      %s42 = sor.u32 %s40, %s41
      %p43 = scmp.eq.s32.totalorder %s42, 0
      %s45 = sadd.s32 %s44, 1
      %s46 = scalar_select %p43, %s44, %s45
      %p49 = pneg %p43
      %p50 = scmp.eq.s32.totalorder %s13, 7
      %p51 = por %p49, %p50
      %p52 = scmp.ne.s32.totalorder %s44, %s47
      %p53 = scmp.eq.s32.totalorder %s13, 0
      %p54 = por %p52, %p53
      %p55 = scmp.ne.s32.totalorder %s44, %s47
      %p56 = scmp.eq.s32.totalorder %s18, 7
      %p57 = por %p55, %p56
      %p58 = scmp.ne.s32.totalorder %s47, %s48
      %p59 = scmp.eq.s32.totalorder %s18, 0
      %p60 = por %p58, %p59
      %p61 = scmp.ne.s32.totalorder %s47, %s48
      %p62 = scmp.eq.s32.totalorder %s19, 7
      %p63 = por %p61, %p62
      %p65 = scmp.ne.s32.totalorder %s48, %s64
      %p66 = scmp.eq.s32.totalorder %s19, 0
      %p67 = por %p65, %p66
      %s68 = ssub.s32 %s21, %s35
      %p69 = scmp.eq.s32.totalorder %s68, 0
      %s71 = sadd.s32 %s70, 1
      %s72 = scalar_select %p69, %s70, %s71
      %p75 = pneg %p69
      %p76 = scmp.eq.s32.totalorder %s13, 7
      %p77 = por %p75, %p76
      %p78 = scmp.ne.s32.totalorder %s70, %s73
      %p79 = scmp.eq.s32.totalorder %s13, 0
      %p80 = por %p78, %p79
      %p81 = scmp.ne.s32.totalorder %s70, %s73
      %p82 = scmp.eq.s32.totalorder %s18, 7
      %p83 = por %p81, %p82
      %p84 = scmp.ne.s32.totalorder %s73, %s74
      %p85 = scmp.eq.s32.totalorder %s18, 0
      %p86 = por %p84, %p85
      %p87 = scmp.ne.s32.totalorder %s73, %s74
      %p88 = scmp.eq.s32.totalorder %s19, 7
      %p89 = por %p87, %p88
      %p91 = scmp.ne.s32.totalorder %s74, %s90
      %p92 = scmp.eq.s32.totalorder %s19, 0
      %p93 = por %p91, %p92
      %s94 = ssub.s32 %s22, %s31
      %p95 = scmp.eq.s32.totalorder %s94, 0
      %s97 = sadd.s32 %s96, 1
      %s98 = scalar_select %p95, %s96, %s97
      %p101 = pneg %p95
      %p102 = scmp.eq.s32.totalorder %s13, 7
      %p103 = por %p101, %p102
      %p104 = scmp.ne.s32.totalorder %s96, %s99
      %p105 = scmp.eq.s32.totalorder %s13, 0
      %p106 = por %p104, %p105
      %p107 = scmp.ne.s32.totalorder %s96, %s99
      %p108 = scmp.eq.s32.totalorder %s18, 7
      %p109 = por %p107, %p108
      %p110 = scmp.ne.s32.totalorder %s99, %s100
      %p111 = scmp.eq.s32.totalorder %s18, 0
      %p112 = por %p110, %p111
      %p113 = scmp.ne.s32.totalorder %s99, %s100
      %p114 = scmp.eq.s32.totalorder %s19, 7
      %p115 = por %p113, %p114
      %p117 = scmp.ne.s32.totalorder %s100, %s116
      %p118 = scmp.eq.s32.totalorder %s19, 0
      %p119 = por %p117, %p118
      %s120 = ssub.s32 %s22, %s31
      %p121 = scmp.eq.s32.totalorder %s120, 0
      %s123 = sadd.s32 %s122, 1
      %s124 = scalar_select %p121, %s122, %s123
      %p127 = pneg %p121
      %p128 = scmp.eq.s32.totalorder %s13, 7
      %p129 = por %p127, %p128
      %p130 = scmp.ne.s32.totalorder %s122, %s125
      %p131 = scmp.eq.s32.totalorder %s13, 0
      %p132 = por %p130, %p131
      %p133 = scmp.ne.s32.totalorder %s122, %s125
      %p134 = scmp.eq.s32.totalorder %s18, 7
      %p135 = por %p133, %p134
      %p136 = scmp.ne.s32.totalorder %s125, %s126
      %p137 = scmp.eq.s32.totalorder %s18, 0
      %p138 = por %p136, %p137
      %p139 = scmp.ne.s32.totalorder %s125, %s126
      %p140 = scmp.eq.s32.totalorder %s19, 7
      %p141 = por %p139, %p140
      %p143 = scmp.ne.s32.totalorder %s126, %s142
      %p144 = scmp.eq.s32.totalorder %s19, 0
      %p145 = por %p143, %p144
      %s146 = ssub.s32 %s20, %s39
      %s147 = ssub.s32 %s21, %s35
      %s148 = sor.u32 %s146, %s147
      %s149 = ssub.s32 %s22, %s31
      %s150 = sor.u32 %s148, %s149
      %p151 = scmp.eq.s32.totalorder %s150, 0
      %s153 = sadd.s32 %s152, 1
      %s154 = scalar_select %p151, %s152, %s153
      %p157 = pneg %p151
      %p158 = scmp.eq.s32.totalorder %s13, 7
      %p159 = por %p157, %p158
      %p160 = scmp.ne.s32.totalorder %s152, %s155
      %p161 = scmp.eq.s32.totalorder %s13, 0
      %p162 = por %p160, %p161
      %p163 = scmp.ne.s32.totalorder %s152, %s155
      %p164 = scmp.eq.s32.totalorder %s18, 7
      %p165 = por %p163, %p164
      %p166 = scmp.ne.s32.totalorder %s155, %s156
      %p167 = scmp.eq.s32.totalorder %s18, 0
      %p168 = por %p166, %p167
      %p169 = scmp.ne.s32.totalorder %s155, %s156
      %p170 = scmp.eq.s32.totalorder %s19, 7
      %p171 = por %p169, %p170
      %p173 = scmp.ne.s32.totalorder %s156, %s172
      %p174 = scmp.eq.s32.totalorder %s19, 0
      %p175 = por %p173, %p174
      %s176 = ssub.s32 %s20, %s39
      %s177 = ssub.s32 %s21, %s35
      %s178 = sor.u32 %s176, %s177
      %s179 = ssub.s32 %s22, %s31
      %s180 = sor.u32 %s178, %s179
      %p181 = scmp.eq.s32.totalorder %s180, 0
      %s183 = sadd.s32 %s182, 1
      %s184 = scalar_select %p181, %s182, %s183
      %p187 = pneg %p181
      %p188 = scmp.eq.s32.totalorder %s13, 7
      %p189 = por %p187, %p188
      %p190 = scmp.ne.s32.totalorder %s182, %s185
      %p191 = scmp.eq.s32.totalorder %s13, 0
      %p192 = por %p190, %p191
      %p193 = scmp.ne.s32.totalorder %s182, %s185
      %p194 = scmp.eq.s32.totalorder %s18, 7
      %p195 = por %p193, %p194
      %p196 = scmp.ne.s32.totalorder %s185, %s186
      %p197 = scmp.eq.s32.totalorder %s18, 0
      %p198 = por %p196, %p197
      %p199 = scmp.ne.s32.totalorder %s185, %s186
      %p200 = scmp.eq.s32.totalorder %s19, 7
      %p201 = por %p199, %p200
      %p203 = scmp.ne.s32.totalorder %s186, %s202
      %p204 = scmp.eq.s32.totalorder %s19, 0
      %p205 = por %p203, %p204
      %s206 = ssub.s32 %s20, %s39
      %s207 = ssub.s32 %s21, %s35
      %s208 = sor.u32 %s206, %s207
      %s209 = ssub.s32 %s22, %s31
      %s210 = sor.u32 %s208, %s209
      %p211 = scmp.eq.s32.totalorder %s210, 0
      %s213 = sadd.s32 %s212, 1
      %s214 = scalar_select %p211, %s212, %s213
      %p217 = pneg %p211
      %p218 = scmp.eq.s32.totalorder %s13, 7
      %p219 = por %p217, %p218
      %p220 = scmp.ne.s32.totalorder %s212, %s215
      %p221 = scmp.eq.s32.totalorder %s13, 0
      %p222 = por %p220, %p221
      %p223 = scmp.ne.s32.totalorder %s212, %s215
      %p224 = scmp.eq.s32.totalorder %s18, 7
      %p225 = por %p223, %p224
      %p226 = scmp.ne.s32.totalorder %s215, %s216
      %p227 = scmp.eq.s32.totalorder %s18, 0
      %p228 = por %p226, %p227
      %p229 = scmp.ne.s32.totalorder %s215, %s216
      %p230 = scmp.eq.s32.totalorder %s19, 7
      %p231 = por %p229, %p230
      %p233 = scmp.ne.s32.totalorder %s216, %s232
      %p234 = scmp.eq.s32.totalorder %s19, 0
      %p235 = por %p233, %p234
      %p236 = scmp.le.s32.totalorder 1, %s13
      %p237 = scmp.lt.s32.totalorder %s13, 9
      %p238 = pnand %p236, %p237
      %p239 = pneg %p238
      // Predicated region
      $region9: #{tpu_custom_call.1} parent=5 // pred_check
        _
      $region10: #{tpu_custom_call.1} parent=5 // pred_check_branch
        %241 = sbr.rel (%p238) target = $region12
      $region11: #{tpu_custom_call.1} parent=5 // pred_region
        %s242 = ssub.s32 %s13, 1
      $region12: #{tpu_custom_call.1} parent=5 // pred_fallthru
        _
      %p243 = scmp.lt.s32.totalorder %s13, 8
      // Predicated region
      $region13: #{tpu_custom_call.1} parent=5 // pred_check
        %p244 = pneg %p243
      $region14: #{tpu_custom_call.1} parent=5 // pred_check_branch
        %246 = sbr.rel (%p244) target = $region16
      $region15: #{tpu_custom_call.1} parent=5 // pred_region
        // Predicated region
        $region17: #{tpu_custom_call.1} parent=15 // pred_check
          %p247 = pneg %p54
        $region18: #{tpu_custom_call.1} parent=15 // pred_check_branch
          %249 = sbr.rel (%p247) target = $region20
        $region19: #{tpu_custom_call.1} parent=15 // pred_region
          %s250 = smul.u32 2, %s22
          %p251 = scmp.lt.s32.totalorder %s20, 1
          %s252 = scalar_select %p251, %s20, 1
          %p253 = scmp.lt.s32.totalorder %s250, 3
          %s254 = scalar_select %p253, %s250, 3
          %s255 = smul.addr %s252, 4
          %s256 = sadd.s32 %s254, %s255
          %s257 = smul.addr %s256, 4
          %s258 = scalar_lea.vmem %s0, %s257
          %s259 = smul.u32 2, %s22
        $region20: #{tpu_custom_call.1} parent=15 // pred_fallthru
          _
        // Predicated region
        $region21: #{tpu_custom_call.1} parent=15 // pred_check
          %p260 = pneg %p80
        $region22: #{tpu_custom_call.1} parent=15 // pred_check_branch
          %262 = sbr.rel (%p260) target = $region24
        $region23: #{tpu_custom_call.1} parent=15 // pred_region
          %p263 = scmp.lt.s32.totalorder %s21, 1
          %s264 = scalar_select %p263, %s21, 1
          %s265 = smul.addr %s264, 8
          %s266 = smul.addr %s265, 4
          %s267 = scalar_lea.vmem %s1, %s266
        $region24: #{tpu_custom_call.1} parent=15 // pred_fallthru
          _
        // Predicated region
        $region25: #{tpu_custom_call.1} parent=15 // pred_check
          %p268 = pneg %p106
        $region26: #{tpu_custom_call.1} parent=15 // pred_check_branch
          %270 = sbr.rel (%p268) target = $region28
        $region27: #{tpu_custom_call.1} parent=15 // pred_region
          %s271 = smul.u32 2, %s22
          %p272 = scmp.lt.s32.totalorder %s271, 3
          %s273 = scalar_select %p272, %s271, 3
          %s274 = smul.addr %s273, 8
          %s275 = scalar_lea.vmem %s2, %s274
          %s276 = smul.u32 2, %s22
        $region28: #{tpu_custom_call.1} parent=15 // pred_fallthru
          _
        // Predicated region
        $region29: #{tpu_custom_call.1} parent=15 // pred_check
          %p277 = pneg %p132
        $region30: #{tpu_custom_call.1} parent=15 // pred_check_branch
          %279 = sbr.rel (%p277) target = $region32
        $region31: #{tpu_custom_call.1} parent=15 // pred_region
          %s280 = smul.u32 2, %s22
          %p281 = scmp.lt.s32.totalorder %s280, 3
          %s282 = scalar_select %p281, %s280, 3
          %s283 = smul.addr %s282, 8
          %s284 = scalar_lea.vmem %s3, %s283
          %s285 = smul.u32 2, %s22
        $region32: #{tpu_custom_call.1} parent=15 // pred_fallthru
          _
      $region16: #{tpu_custom_call.1} parent=5 // pred_fallthru
        _
      %p286 = scmp.le.s32.totalorder 1, %s13
      %p287 = scmp.lt.s32.totalorder %s13, 9
      %p288 = pnand %p286, %p287
      %p289 = pneg %p288
      // Predicated region
      $region33: #{tpu_custom_call.1} parent=5 // pred_check
        _
      $region34: #{tpu_custom_call.1} parent=5 // pred_check_branch
        %291 = sbr.rel (%p288) target = $region36
      $region35: #{tpu_custom_call.1} parent=5 // pred_region
        %s292 = ssub.s32 %s13, 1
        %s293 = smul.u32 2, %s25
        %p294 = scmp.lt.s32.totalorder %s23, 1
        %s295 = scalar_select %p294, %s23, 1
        %p296 = scmp.lt.s32.totalorder %s293, 3
        %s297 = scalar_select %p296, %s293, 3
        %s298 = smul.addr %s295, 4
        %s299 = sadd.s32 %s297, %s298
        %s300 = smul.addr %s299, 4
        %s301 = scalar_lea.vmem %s0, %s300
        %p302 = pneg %p60
        %p303 = pneg %p57
        %p304 = scmp.lt.s32.totalorder %s24, 1
        %s305 = scalar_select %p304, %s24, 1
        %s306 = smul.addr %s305, 8
        %s307 = smul.addr %s306, 4
        %s308 = scalar_lea.vmem %s1, %s307
        %p309 = pneg %p86
        %p310 = pneg %p83
        %s311 = smul.u32 2, %s25
        %p312 = scmp.lt.s32.totalorder %s311, 3
        %s313 = scalar_select %p312, %s311, 3
        %s314 = smul.addr %s313, 8
        %s315 = scalar_lea.vmem %s2, %s314
        %p316 = pneg %p112
        %p317 = pneg %p109
        %s318 = smul.u32 2, %s25
        %p319 = scmp.lt.s32.totalorder %s318, 3
        %s320 = scalar_select %p319, %s318, 3
        %s321 = smul.addr %s320, 8
        %s322 = scalar_lea.vmem %s3, %s321
        %p323 = pneg %p138
        %p324 = pneg %p135
        %p325 = pneg %p168
        %p326 = pneg %p165
        %s327 = sand.u32 %s155, 1
        %s328 = sand.u32 %s155, 1
        %s329 = smul.addr %s328, 16
        %s330 = scalar_lea.vmem [#allocation2], %s329
        %p331 = pneg %p198
        %p332 = pneg %p195
        %s333 = smul.u32 2, %s25
        %p334 = scmp.lt.s32.totalorder %s23, 1
        %s335 = scalar_select %p334, %s23, 1
        %p336 = scmp.lt.s32.totalorder %s24, 1
        %s337 = scalar_select %p336, %s24, 1
        %p338 = scmp.lt.s32.totalorder %s333, 3
        %s339 = scalar_select %p338, %s333, 3
        %s340 = smul.addr %s337, 4
        %s341 = sadd.s32 %s339, %s340
        %s342 = smul.addr %s335, 8
        %s343 = sadd.s32 %s341, %s342
        %s344 = smul.addr %s343, 4
        %s345 = scalar_lea.vmem %s5, %s344
        %p346 = pneg %p228
        %p347 = pneg %p225
        %s348 = smul.u32 2, %s25
        %p349 = scmp.lt.s32.totalorder %s23, 1
        %s350 = scalar_select %p349, %s23, 1
        %p351 = scmp.lt.s32.totalorder %s24, 1
        %s352 = scalar_select %p351, %s24, 1
        %p353 = scmp.lt.s32.totalorder %s348, 3
        %s354 = scalar_select %p353, %s348, 3
        %s355 = smul.addr %s352, 4
        %s356 = sadd.s32 %s354, %s355
        %s357 = smul.addr %s350, 8
        %s358 = sadd.s32 %s356, %s357
        %s359 = smul.addr %s358, 4
        %s360 = scalar_lea.vmem %s6, %s359
        %s361 = smul.u32 2, %s25
        %p362 = scmp.lt.s32.totalorder %s23, 1
        %s363 = scalar_select %p362, %s23, 1
        %p364 = scmp.lt.s32.totalorder %s361, 3
        %s365 = scalar_select %p364, %s361, 3
        %s366 = smul.addr %s363, 4
        %s367 = sadd.s32 %s365, %s366
        %s368 = smul.addr %s367, 4
        %s369 = scalar_lea.vmem %s0, %s368
        %s370 = smul.u32 2, %s25
        %p371 = scmp.lt.s32.totalorder %s24, 1
        %s372 = scalar_select %p371, %s24, 1
        %s373 = smul.addr %s372, 8
        %s374 = smul.addr %s373, 4
        %s375 = scalar_lea.vmem %s1, %s374
        %s376 = smul.u32 2, %s25
        %p377 = scmp.lt.s32.totalorder %s376, 3
        %s378 = scalar_select %p377, %s376, 3
        %s379 = smul.addr %s378, 8
        %s380 = scalar_lea.vmem %s2, %s379
        %s381 = smul.u32 2, %s25
        %s382 = smul.u32 2, %s25
        %p383 = scmp.lt.s32.totalorder %s382, 3
        %s384 = scalar_select %p383, %s382, 3
        %s385 = smul.addr %s384, 8
        %s386 = scalar_lea.vmem %s3, %s385
        %s387 = smul.u32 2, %s25
        %s388 = smul.u32 2, %s24
        %s389 = smul.u32 2, %s25
        %s390 = smul.u32 2, %s25
        %p391 = scmp.lt.s32.totalorder %s23, 1
        %s392 = scalar_select %p391, %s23, 1
        %p393 = scmp.lt.s32.totalorder %s24, 1
        %s394 = scalar_select %p393, %s24, 1
        %p395 = scmp.lt.s32.totalorder %s390, 3
        %s396 = scalar_select %p395, %s390, 3
        %s397 = smul.addr %s394, 4
        %s398 = sadd.s32 %s396, %s397
        %s399 = smul.addr %s392, 8
        %s400 = sadd.s32 %s398, %s399
        %s401 = smul.addr %s400, 4
        %s402 = scalar_lea.vmem %s5, %s401
        %s403 = smul.u32 2, %s25
        %s404 = smul.u32 2, %s25
        %p405 = scmp.lt.s32.totalorder %s23, 1
        %s406 = scalar_select %p405, %s23, 1
        %p407 = scmp.lt.s32.totalorder %s24, 1
        %s408 = scalar_select %p407, %s24, 1
        %p409 = scmp.lt.s32.totalorder %s404, 3
        %s410 = scalar_select %p409, %s404, 3
        %s411 = smul.addr %s408, 4
        %s412 = sadd.s32 %s410, %s411
        %s413 = smul.addr %s406, 8
        %s414 = sadd.s32 %s412, %s413
        %s415 = smul.addr %s414, 4
        %s416 = scalar_lea.vmem %s6, %s415
        %s417 = smul.u32 2, %s25
        %v419 = vld [vmem:[%s369] sm:$0xf]
        %v420 = vld [vmem:[%s369 + $0x4] sm:$0xf]
        %v421 = vld [vmem:[%s375] sm:$0xf]
        %v422 = vld [vmem:[%s375 + $0x4] sm:$0xf]
        %v423 = vld [vmem:[%s375 + $0x8] sm:$0xf]
        %v424 = vld [vmem:[%s375 + $0xc] sm:$0xf]
        %v425 = vld [vmem:[%s375 + $0x10] sm:$0xf]
        %v426 = vld [vmem:[%s375 + $0x14] sm:$0xf]
        %v427 = vld [vmem:[%s375 + $0x18] sm:$0xf]
        %v428 = vld [vmem:[%s375 + $0x1c] sm:$0xf]
        %v431 = vunpack.c.l.b16 %v419
        %v432 = vunpack.c.l.b16 %v420
        %v433 = vpack.c.b16 %v432, %v431
        %v442 = vunpack.c.l.b16 %v421
        %v443 = vunpack.c.l.b16 %v422
        %v444 = vunpack.c.l.b16 %v423
        %v445 = vunpack.c.l.b16 %v424
        %v446 = vunpack.c.l.b16 %v425
        %v447 = vunpack.c.l.b16 %v426
        %v448 = vunpack.c.l.b16 %v427
        %v449 = vunpack.c.l.b16 %v428
        %v450 = vpack.c.b16 %v443, %v442
        %v451 = vpack.c.b16 %v445, %v444
        %v452 = vpack.c.b16 %v447, %v446
        %v453 = vpack.c.b16 %v449, %v448
        %vm458 = vcmask 523264
        %v460 = vsel %vm458, %v433, 0
        %462 = vmatprep.subr.bf16.mxu0 0
        %463 = vmatpush1.bf16.msra.mxu0 %v450
        %464 = vmatprep.subr.bf16.mxu0 0
        %465 = vmatpush1.bf16.msra.mxu0 %v451
        %466 = vmatprep.subr.bf16.mxu0 0
        %467 = vmatpush1.bf16.msra.mxu0 %v452
        %468 = vmatprep.subr.bf16.mxu0 0
        %469 = vmatpush1.bf16.msra.mxu0 %v453
        %470 = vmatprep.subr.bf16.mxu0 0
        %471 = vmatpush1.bf16.msra.mxu0 0
        %472 = vmatprep.subr.bf16.mxu0 0
        %473 = vmatpush1.bf16.msra.mxu0 0
        %474 = vmatprep.subr.bf16.mxu0 0
        %475 = vmatpush1.bf16.msra.mxu0 0
        %476 = vmatprep.subr.bf16.mxu0 0
        %477 = vmatpush1.bf16.msra.mxu0 0
        %478 = vmatprep.subr.bf16.mxu0 0
        %479 = vmatpush1.bf16.msra.mxu0 0
        %480 = vmatprep.subr.bf16.mxu0 0
        %481 = vmatpush1.bf16.msra.mxu0 0
        %482 = vmatprep.subr.bf16.mxu0 0
        %483 = vmatpush1.bf16.msra.mxu0 0
        %484 = vmatprep.subr.bf16.mxu0 0
        %485 = vmatpush1.bf16.msra.mxu0 0
        %486 = vmatprep.subr.bf16.mxu0 0
        %487 = vmatpush1.bf16.msra.mxu0 0
        %488 = vmatprep.subr.bf16.mxu0 0
        %489 = vmatpush1.bf16.msra.mxu0 0
        %490 = vmatprep.subr.bf16.mxu0 0
        %491 = vmatpush1.bf16.msra.mxu0 0
        %492 = vmatprep.subr.bf16.mxu0 0
        %493 = vmatpush1.bf16.msra.mxu0 0
        %494 = vmatprep.mubr.bf16.mxu0 0
        %495 = vmatmul.mubr.bf16.gmra.mrb[0].mxu0 %v460
        %v496 = vpop.f32.mrb[0].mxu0
        %v497 = vadd.f32 0.0, %v496
        %v498 = vpop.f32.mrb[0].mxu0
        %v499 = vpop.f32.mrb[0].mxu0
        %v500 = vadd.f32 0.0, %v499
        %v501 = vpop.f32.mrb[0].mxu0
        %502 = vdwg.mxu0
        %v503 = vld [vmem:[%s380] sm:$0xff]
        %v504 = vld [vmem:[%s380 + $0x8] sm:$0xff]
        %v505 = vld [vmem:[%s386] sm:$0xff]
        %v506 = vld [vmem:[%s386 + $0x8] sm:$0xff]
        %v507 = vmul.f32 %v497, %v503
        %v508 = vmul.f32 %v500, %v504
        %511 = vrot.lane.b32.xlu0 %v497, 120
        %v512 = vpop.permute.xlu0 %511
        %513 = vrot.lane.b32.xlu0 %v500, 120
        %v514 = vpop.permute.xlu0 %513
        %517 = vrot.lane.b32.xlu0 %v497, 8
        %v518 = vpop.permute.xlu0 %517
        %519 = vrot.lane.b32.xlu0 %v500, 8
        %v520 = vpop.permute.xlu0 %519
        %vm523 = vcmask 64512
        %v524 = vsel %vm523, %v512, %v518
        %v525 = vsel %vm523, %v514, %v520
        %v526 = vmul.f32 %v524, %v505
        %v527 = vmul.f32 %v525, %v506
        %v528 = vadd.f32 %v507, %v526
        %v529 = vadd.f32 %v508, %v527
        %v530 = vpack.c.bf16 %v529, %v528
        %v532 = vunpack.c.l.b16 %v530
        %v533 = vunpack.c.h.b16 %v530
        %v534 = vpack.c.b16 %v532, %v532
        %v535 = vpack.c.b16 %v533, %v533
        %vm538 = vcmask 125952
        %539 = vst.msk [vmem:[%s330] sm:$0xf] %vm538, %v534
        %540 = vst.msk [vmem:[%s330 + $0x4] sm:$0xf] %vm538, %v535
        %543 = vrot.lane.b32.xlu0 %v503, 16
        %v544 = vpop.permute.xlu0 %543
        %545 = vrot.lane.b32.xlu0 %v504, 16
        %v546 = vpop.permute.xlu0 %545
        %v549 = vmul.f32 %v497, %v544
        %v550 = vmul.f32 %v500, %v546
        %551 = vrot.lane.b32.xlu0 %v497, 104
        %v552 = vpop.permute.xlu0 %551
        %553 = vrot.lane.b32.xlu0 %v500, 104
        %v554 = vpop.permute.xlu0 %553
        %v557 = vsel %vm523, %v552, %v512
        %v558 = vsel %vm523, %v554, %v514
        %v559 = vmul.f32 %v557, %v505
        %v560 = vmul.f32 %v558, %v506
        %563 = vrot.lane.b32.xlu0 %v559, 16
        %v564 = vpop.permute.xlu0 %563
        %565 = vrot.lane.b32.xlu0 %v560, 16
        %v566 = vpop.permute.xlu0 %565
        %v569 = vadd.f32 %v549, %v564
        %v570 = vadd.f32 %v550, %v566
        %v571 = vpack.c.bf16 %v570, %v569
        %v573 = vunpack.c.l.b16 %v571
        %v574 = vunpack.c.h.b16 %v571
        %v575 = vpack.c.b16 %v573, %v573
        %v576 = vpack.c.b16 %v574, %v574
        %577 = vrot.lane.b32.xlu0 %v575, 112
        %v578 = vpop.permute.xlu0 %577
        %579 = vrot.lane.b32.xlu0 %v576, 112
        %v580 = vpop.permute.xlu0 %579
        %s583 = scalar_lea.vmem %s330, 8 [#allocation2]
        %584 = vst.msk [vmem:[%s583] sm:$0xf] %vm538, %v578
        %585 = vst.msk [vmem:[%s583 + $0x4] sm:$0xf] %vm538, %v580
        %586 = vrot.lane.b32.xlu0 %v503, 32
        %v587 = vpop.permute.xlu0 %586
        %588 = vrot.lane.b32.xlu0 %v504, 32
        %v589 = vpop.permute.xlu0 %588
        %v592 = vmul.f32 %v497, %v587
        %v593 = vmul.f32 %v500, %v589
        %594 = vrot.lane.b32.xlu0 %v497, 88
        %v595 = vpop.permute.xlu0 %594
        %596 = vrot.lane.b32.xlu0 %v500, 88
        %v597 = vpop.permute.xlu0 %596
        %v600 = vsel %vm523, %v595, %v552
        %v601 = vsel %vm523, %v597, %v554
        %v602 = vmul.f32 %v600, %v505
        %v603 = vmul.f32 %v601, %v506
        %606 = vrot.lane.b32.xlu0 %v602, 32
        %v607 = vpop.permute.xlu0 %606
        %608 = vrot.lane.b32.xlu0 %v603, 32
        %v609 = vpop.permute.xlu0 %608
        %v612 = vadd.f32 %v592, %v607
        %v613 = vadd.f32 %v593, %v609
        %v614 = vpack.c.bf16 %v613, %v612
        %v616 = vunpack.c.l.b16 %v614
        %v617 = vunpack.c.h.b16 %v614
        %v618 = vpack.c.b16 %v616, %v616
        %v619 = vpack.c.b16 %v617, %v617
        %620 = vrot.lane.b32.xlu0 %v618, 96
        %v621 = vpop.permute.xlu0 %620
        %622 = vrot.lane.b32.xlu0 %v619, 96
        %v623 = vpop.permute.xlu0 %622
        %626 = vst.msk [vmem:[%s402] sm:$0xf] %vm538, %v621
        %627 = vst.msk [vmem:[%s402 + $0x4] sm:$0xf] %vm538, %v623
        %v628 = vpack.c.bf16 %v500, %v497
        %v630 = vunpack.c.l.b16 %v628
        %v631 = vunpack.c.h.b16 %v628
        %v632 = vpack.c.b16 %v630, %v630
        %v633 = vpack.c.b16 %v631, %v631
        %634 = vrot.lane.b32.xlu0 %v632, 80
        %v635 = vpop.permute.xlu0 %634
        %636 = vrot.lane.b32.xlu0 %v633, 80
        %v637 = vpop.permute.xlu0 %636
        %640 = vst.msk [vmem:[%s416] sm:$0xf] %vm538, %v635
        %641 = vst.msk [vmem:[%s416 + $0x4] sm:$0xf] %vm538, %v637
        %s642 = sand.u32 %s155, 1
        %s643 = sand.u32 %s155, 1
        %s644 = smul.addr %s643, 16
        %s645 = scalar_lea.vmem [#allocation2], %s644
        %s646 = smul.u32 2, %s25
        %p647 = scmp.lt.s32.totalorder %s23, 1
        %s648 = scalar_select %p647, %s23, 1
        %p649 = scmp.lt.s32.totalorder %s24, 1
        %s650 = scalar_select %p649, %s24, 1
        %p651 = scmp.lt.s32.totalorder %s646, 3
        %s652 = scalar_select %p651, %s646, 3
        %s653 = smul.addr %s650, 4
        %s654 = sadd.s32 %s652, %s653
        %s655 = smul.addr %s648, 8
        %s656 = sadd.s32 %s654, %s655
        %s657 = smul.addr %s656, 4
        %s658 = scalar_lea.vmem %s5, %s657
        %s659 = smul.u32 2, %s25
        %p660 = scmp.lt.s32.totalorder %s23, 1
        %s661 = scalar_select %p660, %s23, 1
        %p662 = scmp.lt.s32.totalorder %s24, 1
        %s663 = scalar_select %p662, %s24, 1
        %p664 = scmp.lt.s32.totalorder %s659, 3
        %s665 = scalar_select %p664, %s659, 3
        %s666 = smul.addr %s663, 4
        %s667 = sadd.s32 %s665, %s666
        %s668 = smul.addr %s661, 8
        %s669 = sadd.s32 %s667, %s668
        %s670 = smul.addr %s669, 4
        %s671 = scalar_lea.vmem %s6, %s670
        // Predicated region
        $region37: #{tpu_custom_call.1} parent=35 // pred_check
          %p672 = pneg %p165
        $region38: #{tpu_custom_call.1} parent=35 // pred_check_branch
          %674 = sbr.rel (%p672) target = $region40
        $region39: #{tpu_custom_call.1} parent=35 // pred_region
          %s675 = smul.u32 2, %s24
          %s676 = smul.u32 2, %s25
          %s677 = smul.addr %s675, 4
          %s678 = sadd.s32 %s676, %s677
          %s679 = smul.addr %s23, 16
          %s680 = sadd.s32 %s678, %s679
          %s681 = smul.addr %s680, 4
          %s682 = scalar_lea.vmem %s4, %s681
          // Predicated region
          $region41: #{tpu_custom_call.1} parent=39 // pred_check
            _
          $region42: #{tpu_custom_call.1} parent=39 // pred_check_branch
            %684 = sbr.rel (0) target = $region44
          $region43: #{tpu_custom_call.1} parent=39 // pred_region
            // Predicated region
            $region45: #{tpu_custom_call.1} parent=43 // pred_check
              _
            $region46: #{tpu_custom_call.1} parent=43 // pred_check_branch
              %686 = sbr.rel target = $region48
            $region47: #{tpu_custom_call.1} parent=43 // pred_region
              // Predicated region
              $region60: #{tpu_custom_call.1} parent=47 // pred_check
                _
              $region61: #{tpu_custom_call.1} parent=47 // pred_check_branch
                %707 = sbr.rel (0) target = $region63
              $region62: #{tpu_custom_call.1} parent=47 // pred_region
                loop: start=0, step=1, limit=1
                $region64: #{tpu_custom_call.1} parent=62 // loop_pre_header
                  _
                $region65: #{tpu_custom_call.1} parent=62 // loop_header
                  %s709 = sphi 0, %s713
                  %p710 = scmp.ge.s32.totalorder %s709, 1
                  %s714 = sphi %s645, %s645
                  %s715 = sphi %s682, %s682
                $region66: #{tpu_custom_call.1} parent=62 // loop_header_branch
                  %712 = sbr.rel (%p710) target = $region70
                $region67: #{tpu_custom_call.1} parent=62 // loop_body
                  _
                $region68: #{tpu_custom_call.1} parent=62 // loop_footer
                  %s713 = sadd.s32 1, %s709
                $region69: #{tpu_custom_call.1} parent=62 // loop_footer_branch
                  %708 = sbr.rel target = $region65
                $region70: #{tpu_custom_call.1} parent=62 // loop_exit
                  _
                loop: start=0, step=1, limit=1
                $region71: #{tpu_custom_call.1} parent=62 // loop_pre_header
                  _
                $region72: #{tpu_custom_call.1} parent=62 // loop_header
                  %s718 = sphi 0, %s722
                  %p719 = scmp.ge.s32.totalorder %s718, 1
                  %s723 = sphi %s645, %s645
                  %s724 = sphi %s682, %s682
                $region73: #{tpu_custom_call.1} parent=62 // loop_header_branch
                  %721 = sbr.rel (%p719) target = $region77
                $region74: #{tpu_custom_call.1} parent=62 // loop_body
                  %v725 = vld [vmem:[%s723] sm:$0xf]
                  %726 = vst [vmem:[%s724] sm:$0xf] %v725
                  %v727 = vld [vmem:[%s723 + $0x4] sm:$0xf]
                  %728 = vst [vmem:[%s724 + $0x4] sm:$0xf] %v727
                  %v729 = vld [vmem:[%s723 + $0x8] sm:$0xf]
                  %730 = vst [vmem:[%s724 + $0x10] sm:$0xf] %v729
                  %v731 = vld [vmem:[%s723 + $0xc] sm:$0xf]
                  %732 = vst [vmem:[%s724 + $0x14] sm:$0xf] %v731
                $region75: #{tpu_custom_call.1} parent=62 // loop_footer
                  %s722 = sadd.s32 1, %s718
                $region76: #{tpu_custom_call.1} parent=62 // loop_footer_branch
                  %717 = sbr.rel target = $region72
                $region77: #{tpu_custom_call.1} parent=62 // loop_exit
                  _
              $region63: #{tpu_custom_call.1} parent=47 // pred_fallthru
                _
            $region48: #{tpu_custom_call.1} parent=43 // pred_fallthru
              _
            // Predicated region
            $region49: #{tpu_custom_call.1} parent=43 // pred_check
              _
            $region50: #{tpu_custom_call.1} parent=43 // pred_check_branch
              %688 = sbr.rel (0) target = $region52
            $region51: #{tpu_custom_call.1} parent=43 // pred_region
              loop: start=0, step=1, limit=1
              $region53: #{tpu_custom_call.1} parent=51 // loop_pre_header
                _
              $region54: #{tpu_custom_call.1} parent=51 // loop_header
                %s691 = sphi 0, %s695
                %p692 = scmp.ge.s32.totalorder %s691, 1
                %s696 = sphi %s645, %s645
                %s697 = sphi %s682, %s682
              $region55: #{tpu_custom_call.1} parent=51 // loop_header_branch
                %694 = sbr.rel (%p692) target = $region59
              $region56: #{tpu_custom_call.1} parent=51 // loop_body
                %v698 = vld [vmem:[%s696] sm:$0xf]
                %699 = vst [vmem:[%s697] sm:$0xf] %v698
                %v700 = vld [vmem:[%s696 + $0x4] sm:$0xf]
                %701 = vst [vmem:[%s697 + $0x4] sm:$0xf] %v700
                %v702 = vld [vmem:[%s696 + $0x8] sm:$0xf]
                %703 = vst [vmem:[%s697 + $0x10] sm:$0xf] %v702
                %v704 = vld [vmem:[%s696 + $0xc] sm:$0xf]
                %705 = vst [vmem:[%s697 + $0x14] sm:$0xf] %v704
              $region57: #{tpu_custom_call.1} parent=51 // loop_footer
                %s695 = sadd.s32 1, %s691
              $region58: #{tpu_custom_call.1} parent=51 // loop_footer_branch
                %690 = sbr.rel target = $region54
              $region59: #{tpu_custom_call.1} parent=51 // loop_exit
                _
            $region52: #{tpu_custom_call.1} parent=43 // pred_fallthru
              _
          $region44: #{tpu_custom_call.1} parent=39 // pred_fallthru
            _
          %733 = vnop
        $region40: #{tpu_custom_call.1} parent=35 // pred_fallthru
          _
        // Predicated region
        $region78: #{tpu_custom_call.1} parent=35 // pred_check
          %p734 = pneg %p195
        $region79: #{tpu_custom_call.1} parent=35 // pred_check_branch
          %736 = sbr.rel (%p734) target = $region81
        $region80: #{tpu_custom_call.1} parent=35 // pred_region
          %s737 = smul.u32 2, %s25
        $region81: #{tpu_custom_call.1} parent=35 // pred_fallthru
          _
        // Predicated region
        $region82: #{tpu_custom_call.1} parent=35 // pred_check
          %p738 = pneg %p225
        $region83: #{tpu_custom_call.1} parent=35 // pred_check_branch
          %740 = sbr.rel (%p738) target = $region85
        $region84: #{tpu_custom_call.1} parent=35 // pred_region
          %s741 = smul.u32 2, %s25
        $region85: #{tpu_custom_call.1} parent=35 // pred_fallthru
          _
      $region36: #{tpu_custom_call.1} parent=5 // pred_fallthru
        _
      %p742 = scmp.le.s32.totalorder 2, %s13
      // Predicated region
      $region86: #{tpu_custom_call.1} parent=5 // pred_check
        %p743 = pneg %p742
      $region87: #{tpu_custom_call.1} parent=5 // pred_check_branch
        %745 = sbr.rel (%p743) target = $region89
      $region88: #{tpu_custom_call.1} parent=5 // pred_region
        %s746 = ssub.s32 %s13, 2
        // Predicated region
        $region90: #{tpu_custom_call.1} parent=88 // pred_check
          %p747 = pneg %p171
        $region91: #{tpu_custom_call.1} parent=88 // pred_check_branch
          %749 = sbr.rel (%p747) target = $region93
        $region92: #{tpu_custom_call.1} parent=88 // pred_region
          %s750 = sand.u32 %s156, 1
          %s751 = sand.u32 %s156, 1
          %s752 = smul.addr %s751, 16
          %s753 = scalar_lea.vmem [#allocation2], %s752
        $region93: #{tpu_custom_call.1} parent=88 // pred_fallthru
          _
        // Predicated region
        $region94: #{tpu_custom_call.1} parent=88 // pred_check
          %p754 = pneg %p201
        $region95: #{tpu_custom_call.1} parent=88 // pred_check_branch
          %756 = sbr.rel (%p754) target = $region97
        $region96: #{tpu_custom_call.1} parent=88 // pred_region
          %s757 = smul.u32 2, %s28
          %p758 = scmp.lt.s32.totalorder %s26, 1
          %s759 = scalar_select %p758, %s26, 1
          %p760 = scmp.lt.s32.totalorder %s27, 1
          %s761 = scalar_select %p760, %s27, 1
          %p762 = scmp.lt.s32.totalorder %s757, 3
          %s763 = scalar_select %p762, %s757, 3
          %s764 = smul.addr %s761, 4
          %s765 = sadd.s32 %s763, %s764
          %s766 = smul.addr %s759, 8
          %s767 = sadd.s32 %s765, %s766
          %s768 = smul.addr %s767, 4
          %s769 = scalar_lea.vmem %s5, %s768
        $region97: #{tpu_custom_call.1} parent=88 // pred_fallthru
          _
        // Predicated region
        $region98: #{tpu_custom_call.1} parent=88 // pred_check
          %p770 = pneg %p231
        $region99: #{tpu_custom_call.1} parent=88 // pred_check_branch
          %772 = sbr.rel (%p770) target = $region101
        $region100: #{tpu_custom_call.1} parent=88 // pred_region
          %s773 = smul.u32 2, %s28
          %p774 = scmp.lt.s32.totalorder %s26, 1
          %s775 = scalar_select %p774, %s26, 1
          %p776 = scmp.lt.s32.totalorder %s27, 1
          %s777 = scalar_select %p776, %s27, 1
          %p778 = scmp.lt.s32.totalorder %s773, 3
          %s779 = scalar_select %p778, %s773, 3
          %s780 = smul.addr %s777, 4
          %s781 = sadd.s32 %s779, %s780
          %s782 = smul.addr %s775, 8
          %s783 = sadd.s32 %s781, %s782
          %s784 = smul.addr %s783, 4
          %s785 = scalar_lea.vmem %s6, %s784
        $region101: #{tpu_custom_call.1} parent=88 // pred_fallthru
          _
      $region89: #{tpu_custom_call.1} parent=5 // pred_fallthru
        _
    $region6: #{tpu_custom_call.1} parent=1 // loop_footer
      %s17 = sadd.s32 1, %s13
    $region7: #{tpu_custom_call.1} parent=1 // loop_footer_branch
      %12 = sbr.rel target = $region3
    $region8: #{tpu_custom_call.1} parent=1 // loop_exit
      _

</llo_original>
